<compile_context>
chip_gen: v7x
topology: tpu7x:2x2x1
jax: 0.10.0
libtpu: 0.0.40
codegen_flags: <defaults>
</compile_context>

<pallas_src>
import jax
import jax.numpy as jnp
from jax.experimental import pallas as pl
from jax.experimental.pallas import tpu as pltpu


def _round_up(x, m):
    return ((x + m - 1) // m) * m


# ----------------------------------------------------------------------------
# Pallas kernel: per-example margin-ranking hinge for one batch tile.
# ----------------------------------------------------------------------------
def _murp_hinge_kernel(params_ref, emb_ref, hinge_ref):
    """params_ref : SMEM (2,) f32 -> [c, margin]
       emb_ref    : VMEM (TB, 6, D) f32, slot order
                    [pos_head, pos_rel, pos_tail, neg_head, neg_rel, neg_tail]
       hinge_ref  : VMEM (TB, 1) f32 -> max(0, neg_score - pos_score + margin)
    """
    c = params_ref[0]
    margin = params_ref[1]

    emb = emb_ref[...]                      # (TB, 6, D), loaded once
    h_p, r_p, t_p = emb[:, 0, :], emb[:, 1, :], emb[:, 2, :]
    h_n, r_n, t_n = emb[:, 3, :], emb[:, 4, :], emb[:, 5, :]

    def score(h, r, t):
        # Möbius addition in the Poincaré ball, then score = -||(h (+)_c r) - t||_2.
        xy = jnp.sum(h * r, axis=-1, keepdims=True)      # (TB, 1)
        x2 = jnp.sum(h * h, axis=-1, keepdims=True)
        y2 = jnp.sum(r * r, axis=-1, keepdims=True)
        num = (1.0 + 2.0 * c * xy + c * y2) * h + (1.0 - c * x2) * r
        den = 1.0 + 2.0 * c * xy + (c * c) * x2 * y2
        d = num / den - t
        return -jnp.sqrt(jnp.sum(d * d, axis=-1, keepdims=True))  # (TB, 1)

    pos = score(h_p, r_p, t_p)
    neg = score(h_n, r_n, t_n)
    # MarginRankingLoss(margin)(pos, neg, target=+1) elementwise term.
    hinge_ref[...] = jnp.maximum(neg - pos + margin, 0.0)


def murp_hinge_pallas(packed_emb, c, margin, *, block_batch):
    """packed_emb: (B_pad, 6, D) f32.  Returns per-example hinge terms (B_pad, 1)."""
    b_pad, six, d = packed_emb.shape
    assert six == 6 and b_pad % block_batch == 0

    params = jnp.array([c, margin], dtype=jnp.float32)
    grid = (b_pad // block_batch,)

    return pl.pallas_call(
        _murp_hinge_kernel,
        out_shape=jax.ShapeDtypeStruct((b_pad, 1), jnp.float32),
        grid=grid,
        in_specs=[
            pl.BlockSpec(memory_space=pltpu.MemorySpace.SMEM),          # [c, margin]
            pl.BlockSpec((block_batch, 6, d), lambda i: (i, 0, 0)),     # packed embeddings
        ],
        out_specs=pl.BlockSpec((block_batch, 1), lambda i: (i, 0)),
        compiler_params=pltpu.CompilerParams(
            dimension_semantics=("parallel",),        # independent batch tiles (v7x 2-TC)
            vmem_limit_bytes=32 * 1024 * 1024,        # safe on v5e/v6e/v7x for TB<=512
        ),
    )(params, packed_emb)


# ----------------------------------------------------------------------------
# MurP "module": deterministic parameter init + forward (loss) wrapper.
# ----------------------------------------------------------------------------
class MurP:
    def __init__(self, num_entities, num_relations, embedding_dim, c=1.0, key=None):
        self.num_entities = num_entities
        self.num_relations = num_relations
        self.embedding_dim = embedding_dim
        self.c = float(c)
        self.margin = 1.0  # nn.MarginRankingLoss(margin=1.0) in MurP.forward

        key = jax.random.PRNGKey(0) if key is None else key
        k1, k2 = jax.random.split(key)
        bound = 6.0 / (embedding_dim ** 0.5)
        self.entity_embeddings = jax.random.uniform(
            k1, (num_entities, embedding_dim), jnp.float32, -bound, bound)
        self.relation_embeddings = jax.random.uniform(
            k2, (num_relations, embedding_dim), jnp.float32, -bound, bound)
        # Combined table so one fused gather fetches all six rows per example.
        self._table = jnp.concatenate(
            [self.entity_embeddings, self.relation_embeddings], axis=0)

    def _packed_indices(self, pos_triplets, neg_triplets):
        e = self.num_entities
        idx = jnp.stack([
            pos_triplets[:, 0], e + pos_triplets[:, 1], pos_triplets[:, 2],
            neg_triplets[:, 0], e + neg_triplets[:, 1], neg_triplets[:, 2],
        ], axis=1)
        return idx.astype(jnp.int32)                  # (B, 6)

    def forward(self, pos_triplets, neg_triplets):
        b = pos_triplets.shape[0]
        block_batch = min(512, _round_up(b, 8))       # multiple of 8 sublanes, VMEM-safe
        b_pad = _round_up(b, block_batch)

        idx = self._packed_indices(pos_triplets, neg_triplets)
        if b_pad != b:
            # Padded rows gather valid row 0; they are dropped before the mean.
            idx = jnp.pad(idx, ((0, b_pad - b), (0, 0)))

        packed = self._table[idx]                     # (B_pad, 6, D) — single XLA gather
        hinge = murp_hinge_pallas(packed, self.c, self.margin, block_batch=block_batch)
        return jnp.mean(hinge[:b, 0])


# ----------------------------------------------------------------------------
# Pure-JAX reference for sanity checking.
# ----------------------------------------------------------------------------
def _reference_loss(model, pos_triplets, neg_triplets):
    c = model.c

    def mobius_add(x, y):
        xy = jnp.sum(x * y, axis=-1, keepdims=True)
        x2 = jnp.sum(x * x, axis=-1, keepdims=True)
        y2 = jnp.sum(y * y, axis=-1, keepdims=True)
        num = (1 + 2 * c * xy + c * y2) * x + (1 - c * x2) * y
        den = 1 + 2 * c * xy + c ** 2 * x2 * y2
        return num / den

    def score(trip):
        h = model.entity_embeddings[trip[:, 0]]
        r = model.relation_embeddings[trip[:, 1]]
        t = model.entity_embeddings[trip[:, 2]]
        return -jnp.linalg.norm(mobius_add(h, r) - t, axis=1)

    p = score(pos_triplets)
    n = score(neg_triplets)
    return jnp.mean(jnp.maximum(n - p + model.margin, 0.0))


if __name__ == "__main__":
    num_entities = 32
    num_relations = 8
    embedding_dim = 32
    batch = 8

    model = MurP(num_entities, num_relations, embedding_dim, c=1.0,
                 key=jax.random.PRNGKey(0))

    kd = jax.random.PRNGKey(0)
    k_ph, k_pr, k_pt, k_nh, k_nr, k_nt = jax.random.split(kd, 6)
    pos_triplets = jnp.stack([
        jax.random.randint(k_ph, (batch,), 0, num_entities),
        jax.random.randint(k_pr, (batch,), 0, num_relations),
        jax.random.randint(k_pt, (batch,), 0, num_entities),
    ], axis=1).astype(jnp.int32)
    neg_triplets = jnp.stack([
        jax.random.randint(k_nh, (batch,), 0, num_entities),
        jax.random.randint(k_nr, (batch,), 0, num_relations),
        jax.random.randint(k_nt, (batch,), 0, num_entities),
    ], axis=1).astype(jnp.int32)

    loss = jax.block_until_ready(model.forward(pos_triplets, neg_triplets))
    ref = jax.block_until_ready(_reference_loss(model, pos_triplets, neg_triplets))
    assert jnp.allclose(loss, ref, rtol=1e-4, atol=1e-4), (loss, ref)

    print("KERNEL_OK")
</pallas_src>

<mosaic_0001>
module attributes {stable_mosaic.version = 11 : i64} {
  func.func @_murp_hinge_kernel(%arg0: i32, %arg1: memref<2xf32, #tpu.memory_space<smem>>, %arg2: memref<8x6x32xf32, #tpu.memory_space<vmem>>, %arg3: memref<8x1xf32, #tpu.memory_space<vmem>>) attributes {dimension_semantics = [#tpu.dimension_semantics<parallel>], iteration_bounds = array<i64: 1>, scalar_prefetch = 0 : i64, scratch_operands = 0 : i64, tpu.core_type = #tpu.core_type<tc>, window_params = [{transform_indices = @transform_0, window_bounds = array<i64: 2>}, {transform_indices = @transform_1, window_bounds = array<i64: 8, 6, 32>}, {transform_indices = @transform_2, window_bounds = array<i64: 8, 1>}]} {
    %c0 = arith.constant 0 : index
    %0 = memref.load %arg1[%c0] : memref<2xf32, #tpu.memory_space<smem>>
    %c1 = arith.constant 1 : index
    %1 = memref.load %arg1[%c1] : memref<2xf32, #tpu.memory_space<smem>>
    %c0_0 = arith.constant 0 : index
    %c0_1 = arith.constant 0 : index
    %c0_2 = arith.constant 0 : index
    %2 = vector.load %arg2[%c0_0, %c0_1, %c0_2] : memref<8x6x32xf32, #tpu.memory_space<vmem>>, vector<8x6x32xf32>
    %3 = vector.extract_strided_slice %2 {offsets = [0, 0, 0], sizes = [8, 1, 32], strides = [1, 1, 1]} : vector<8x6x32xf32> to vector<8x1x32xf32>
    %4 = vector.shape_cast %3 : vector<8x1x32xf32> to vector<8x32xf32>
    %5 = vector.extract_strided_slice %2 {offsets = [0, 1, 0], sizes = [8, 1, 32], strides = [1, 1, 1]} : vector<8x6x32xf32> to vector<8x1x32xf32>
    %6 = vector.shape_cast %5 : vector<8x1x32xf32> to vector<8x32xf32>
    %7 = vector.extract_strided_slice %2 {offsets = [0, 2, 0], sizes = [8, 1, 32], strides = [1, 1, 1]} : vector<8x6x32xf32> to vector<8x1x32xf32>
    %8 = vector.shape_cast %7 : vector<8x1x32xf32> to vector<8x32xf32>
    %9 = vector.extract_strided_slice %2 {offsets = [0, 3, 0], sizes = [8, 1, 32], strides = [1, 1, 1]} : vector<8x6x32xf32> to vector<8x1x32xf32>
    %10 = vector.shape_cast %9 : vector<8x1x32xf32> to vector<8x32xf32>
    %11 = vector.extract_strided_slice %2 {offsets = [0, 4, 0], sizes = [8, 1, 32], strides = [1, 1, 1]} : vector<8x6x32xf32> to vector<8x1x32xf32>
    %12 = vector.shape_cast %11 : vector<8x1x32xf32> to vector<8x32xf32>
    %13 = vector.extract_strided_slice %2 {offsets = [0, 5, 0], sizes = [8, 1, 32], strides = [1, 1, 1]} : vector<8x6x32xf32> to vector<8x1x32xf32>
    %14 = vector.shape_cast %13 : vector<8x1x32xf32> to vector<8x32xf32>
    %15 = arith.mulf %4, %6 : vector<8x32xf32>
    %cst = arith.constant dense<0.000000e+00> : vector<8xf32>
    %16 = vector.multi_reduction <add>, %15, %cst [1] : vector<8x32xf32> to vector<8xf32>
    %17 = vector.shape_cast %16 : vector<8xf32> to vector<8x1xf32>
    %18 = arith.mulf %4, %4 : vector<8x32xf32>
    %cst_3 = arith.constant dense<0.000000e+00> : vector<8xf32>
    %19 = vector.multi_reduction <add>, %18, %cst_3 [1] : vector<8x32xf32> to vector<8xf32>
    %20 = vector.shape_cast %19 : vector<8xf32> to vector<8x1xf32>
    %21 = arith.mulf %6, %6 : vector<8x32xf32>
    %cst_4 = arith.constant dense<0.000000e+00> : vector<8xf32>
    %22 = vector.multi_reduction <add>, %21, %cst_4 [1] : vector<8x32xf32> to vector<8xf32>
    %23 = vector.shape_cast %22 : vector<8xf32> to vector<8x1xf32>
    %cst_5 = arith.constant 2.000000e+00 : f32
    %24 = arith.mulf %cst_5, %0 : f32
    %25 = vector.broadcast %24 : f32 to vector<8x1xf32>
    %26 = arith.mulf %25, %17 : vector<8x1xf32>
    %cst_6 = arith.constant 1.000000e+00 : f32
    %27 = vector.broadcast %cst_6 : f32 to vector<8x1xf32>
    %28 = arith.addf %27, %26 : vector<8x1xf32>
    %29 = vector.broadcast %0 : f32 to vector<8x1xf32>
    %30 = arith.mulf %29, %23 : vector<8x1xf32>
    %31 = arith.addf %28, %30 : vector<8x1xf32>
    %32 = vector.broadcast %31 : vector<8x1xf32> to vector<8x32xf32>
    %33 = arith.mulf %32, %4 : vector<8x32xf32>
    %34 = vector.broadcast %0 : f32 to vector<8x1xf32>
    %35 = arith.mulf %34, %20 : vector<8x1xf32>
    %cst_7 = arith.constant 1.000000e+00 : f32
    %36 = vector.broadcast %cst_7 : f32 to vector<8x1xf32>
    %37 = arith.subf %36, %35 : vector<8x1xf32>
    %38 = vector.broadcast %37 : vector<8x1xf32> to vector<8x32xf32>
    %39 = arith.mulf %38, %6 : vector<8x32xf32>
    %40 = arith.addf %33, %39 : vector<8x32xf32>
    %cst_8 = arith.constant 2.000000e+00 : f32
    %41 = arith.mulf %cst_8, %0 : f32
    %42 = vector.broadcast %41 : f32 to vector<8x1xf32>
    %43 = arith.mulf %42, %17 : vector<8x1xf32>
    %cst_9 = arith.constant 1.000000e+00 : f32
    %44 = vector.broadcast %cst_9 : f32 to vector<8x1xf32>
    %45 = arith.addf %44, %43 : vector<8x1xf32>
    %46 = arith.mulf %0, %0 : f32
    %47 = vector.broadcast %46 : f32 to vector<8x1xf32>
    %48 = arith.mulf %47, %20 : vector<8x1xf32>
    %49 = arith.mulf %48, %23 : vector<8x1xf32>
    %50 = arith.addf %45, %49 : vector<8x1xf32>
    %51 = vector.broadcast %50 : vector<8x1xf32> to vector<8x32xf32>
    %52 = arith.divf %40, %51 : vector<8x32xf32>
    %53 = arith.subf %52, %8 : vector<8x32xf32>
    %54 = arith.mulf %53, %53 : vector<8x32xf32>
    %cst_10 = arith.constant dense<0.000000e+00> : vector<8xf32>
    %55 = vector.multi_reduction <add>, %54, %cst_10 [1] : vector<8x32xf32> to vector<8xf32>
    %56 = vector.shape_cast %55 : vector<8xf32> to vector<8x1xf32>
    %57 = math.sqrt %56 : vector<8x1xf32>
    %cst_11 = arith.constant 0.000000e+00 : f32
    %58 = vector.broadcast %cst_11 : f32 to vector<8x1xf32>
    %59 = arith.subf %58, %57 : vector<8x1xf32>
    %60 = arith.mulf %10, %12 : vector<8x32xf32>
    %cst_12 = arith.constant dense<0.000000e+00> : vector<8xf32>
    %61 = vector.multi_reduction <add>, %60, %cst_12 [1] : vector<8x32xf32> to vector<8xf32>
    %62 = vector.shape_cast %61 : vector<8xf32> to vector<8x1xf32>
    %63 = arith.mulf %10, %10 : vector<8x32xf32>
    %cst_13 = arith.constant dense<0.000000e+00> : vector<8xf32>
    %64 = vector.multi_reduction <add>, %63, %cst_13 [1] : vector<8x32xf32> to vector<8xf32>
    %65 = vector.shape_cast %64 : vector<8xf32> to vector<8x1xf32>
    %66 = arith.mulf %12, %12 : vector<8x32xf32>
    %cst_14 = arith.constant dense<0.000000e+00> : vector<8xf32>
    %67 = vector.multi_reduction <add>, %66, %cst_14 [1] : vector<8x32xf32> to vector<8xf32>
    %68 = vector.shape_cast %67 : vector<8xf32> to vector<8x1xf32>
    %cst_15 = arith.constant 2.000000e+00 : f32
    %69 = arith.mulf %cst_15, %0 : f32
    %70 = vector.broadcast %69 : f32 to vector<8x1xf32>
    %71 = arith.mulf %70, %62 : vector<8x1xf32>
    %cst_16 = arith.constant 1.000000e+00 : f32
    %72 = vector.broadcast %cst_16 : f32 to vector<8x1xf32>
    %73 = arith.addf %72, %71 : vector<8x1xf32>
    %74 = vector.broadcast %0 : f32 to vector<8x1xf32>
    %75 = arith.mulf %74, %68 : vector<8x1xf32>
    %76 = arith.addf %73, %75 : vector<8x1xf32>
    %77 = vector.broadcast %76 : vector<8x1xf32> to vector<8x32xf32>
    %78 = arith.mulf %77, %10 : vector<8x32xf32>
    %79 = vector.broadcast %0 : f32 to vector<8x1xf32>
    %80 = arith.mulf %79, %65 : vector<8x1xf32>
    %cst_17 = arith.constant 1.000000e+00 : f32
    %81 = vector.broadcast %cst_17 : f32 to vector<8x1xf32>
    %82 = arith.subf %81, %80 : vector<8x1xf32>
    %83 = vector.broadcast %82 : vector<8x1xf32> to vector<8x32xf32>
    %84 = arith.mulf %83, %12 : vector<8x32xf32>
    %85 = arith.addf %78, %84 : vector<8x32xf32>
    %cst_18 = arith.constant 2.000000e+00 : f32
    %86 = arith.mulf %cst_18, %0 : f32
    %87 = vector.broadcast %86 : f32 to vector<8x1xf32>
    %88 = arith.mulf %87, %62 : vector<8x1xf32>
    %cst_19 = arith.constant 1.000000e+00 : f32
    %89 = vector.broadcast %cst_19 : f32 to vector<8x1xf32>
    %90 = arith.addf %89, %88 : vector<8x1xf32>
    %91 = arith.mulf %0, %0 : f32
    %92 = vector.broadcast %91 : f32 to vector<8x1xf32>
    %93 = arith.mulf %92, %65 : vector<8x1xf32>
    %94 = arith.mulf %93, %68 : vector<8x1xf32>
    %95 = arith.addf %90, %94 : vector<8x1xf32>
    %96 = vector.broadcast %95 : vector<8x1xf32> to vector<8x32xf32>
    %97 = arith.divf %85, %96 : vector<8x32xf32>
    %98 = arith.subf %97, %14 : vector<8x32xf32>
    %99 = arith.mulf %98, %98 : vector<8x32xf32>
    %cst_20 = arith.constant dense<0.000000e+00> : vector<8xf32>
    %100 = vector.multi_reduction <add>, %99, %cst_20 [1] : vector<8x32xf32> to vector<8xf32>
    %101 = vector.shape_cast %100 : vector<8xf32> to vector<8x1xf32>
    %102 = math.sqrt %101 : vector<8x1xf32>
    %cst_21 = arith.constant 0.000000e+00 : f32
    %103 = vector.broadcast %cst_21 : f32 to vector<8x1xf32>
    %104 = arith.subf %103, %102 : vector<8x1xf32>
    %105 = arith.subf %104, %59 : vector<8x1xf32>
    %106 = vector.broadcast %1 : f32 to vector<8x1xf32>
    %107 = arith.addf %105, %106 : vector<8x1xf32>
    %cst_22 = arith.constant 0.000000e+00 : f32
    %108 = vector.broadcast %cst_22 : f32 to vector<8x1xf32>
    %109 = arith.maximumf %107, %108 : vector<8x1xf32>
    %c0_23 = arith.constant 0 : index
    %c0_24 = arith.constant 0 : index
    %110 = vector.load %arg3[%c0_23, %c0_24] : memref<8x1xf32, #tpu.memory_space<vmem>>, vector<8x1xf32>
    tpu.vector_store %arg3[%c0_23, %c0_24], %109 {strides = array<i32>} : memref<8x1xf32, #tpu.memory_space<vmem>>, vector<8x1xf32>,
    return
  }
  func.func @transform_0(%arg0: i32) -> i32 {
    %c0_i32 = arith.constant 0 : i32
    %c0_i32_0 = arith.constant 0 : i32
    return %c0_i32 : i32
  }
  func.func @transform_1(%arg0: i32) -> (i32, i32, i32) {
    %c0_i32 = arith.constant 0 : i32
    %c0_i32_0 = arith.constant 0 : i32
    %c0_i32_1 = arith.constant 0 : i32
    return %arg0, %c0_i32, %c0_i32_0 : i32, i32, i32
  }
  func.func @transform_2(%arg0: i32) -> (i32, i32) {
    %c0_i32 = arith.constant 0 : i32
    %c0_i32_0 = arith.constant 0 : i32
    return %arg0, %c0_i32 : i32, i32
  }
}

</mosaic_0001>

<llo_original>
// kernel: tpu_custom_call.1
$region0: #{tpu_custom_call.1}
  #allocation0 [shape = 'u32[]', space=smem, size = 0x4, offset = 0x4, fixed_abs, tag = 'smem constant byte address 0x4 - core index']
  #allocation1 [shape = 'u32[144,128]{1,0:T(1,128)}', space=vmem, size = 0x12000, scoped, tag = 'internal scratch']
  %s0 = inlined_call_operand.vmem [shape: f32[2], index: 0, kind: input, shape index: {}]
  %s1 = inlined_call_operand.vmem [shape: f32[8,6,32], index: 1, kind: input, shape index: {}]
  %s2 = inlined_call_operand.vmem [shape: f32[8,1], index: 2, kind: output, shape index: {}]
  %s3 = sld [smem:[#allocation0]]
  $region22: #{tpu_custom_call.1} parent=0
    _
  %s5 = ssub.s32 1, %s3
  %s6 = scalar_select 0, %s5, %s3
  $region1: #{tpu_custom_call.1} parent=0
    #allocation2 [shape = 'u8[512]{0}', space=smem, size = 0x200, scoped, tag = 'input window, operand 0, single buffered']
    #allocation3 [shape = 's32[1]{0}', space=sflag, size = 0x4, scoped, tag = 'scoped memory for tpu_custom_call.1']
    %7 = vsyncpa [#allocation3], 0
    // Predicated region
    $region2: #{tpu_custom_call.1} parent=1 // pred_check
      _
    $region3: #{tpu_custom_call.1} parent=1 // pred_check_branch
      %9 = sbr.rel (0) target = $region5
    $region4: #{tpu_custom_call.1} parent=1 // pred_region
      %s11 = ssub.s32 16, 16
      %12 = vsyncadd [#allocation3], %s11
      %s14 = sshll.u32 %s0, 4
      %s15 = int_to_ptr.vmem [resolvable:$true] %s14
      %17 = dma.vmem_to_smem %s15, 16, [#allocation2], [#allocation3]
    $region5: #{tpu_custom_call.1} parent=1 // pred_fallthru
      _
    // Predicated region
    $region6: #{tpu_custom_call.1} parent=1 // pred_check
      _
    $region7: #{tpu_custom_call.1} parent=1 // pred_check_branch
      %19 = sbr.rel (0) target = $region9
    $region8: #{tpu_custom_call.1} parent=1 // pred_region
      _
    $region9: #{tpu_custom_call.1} parent=1 // pred_fallthru
      _
    // Predicated region
    $region10: #{tpu_custom_call.1} parent=1 // pred_check
      _
    $region11: #{tpu_custom_call.1} parent=1 // pred_check_branch
      %21 = sbr.rel (0) target = $region13
    $region12: #{tpu_custom_call.1} parent=1 // pred_region
      %22 = dma.done [#allocation3], 16
    $region13: #{tpu_custom_call.1} parent=1 // pred_fallthru
      _
    %23 = sfence
    %s24 = sld [smem:[#allocation2]]
    %s25 = sld [smem:[#allocation2 + $0x1]]
    %v26 = vld [vmem:[%s1] sm:$0x3f]
    %v27 = vld [vmem:[%s1 + $0x8] sm:$0x3f]
    %v28 = vld [vmem:[%s1 + $0x10] sm:$0x3f]
    %v29 = vld [vmem:[%s1 + $0x18] sm:$0x3f]
    %v30 = vld [vmem:[%s1 + $0x20] sm:$0x3f]
    %v31 = vld [vmem:[%s1 + $0x28] sm:$0x3f]
    %v32 = vld [vmem:[%s1 + $0x30] sm:$0x3f]
    %v33 = vld [vmem:[%s1 + $0x38] sm:$0x3f]
    %v42 = vrot.slane %v26, 1
    %v43 = vrot.slane %v27, 1
    %v44 = vrot.slane %v28, 1
    %v45 = vrot.slane %v29, 1
    %v46 = vrot.slane %v30, 1
    %v47 = vrot.slane %v31, 1
    %v48 = vrot.slane %v32, 1
    %v49 = vrot.slane %v33, 1
    %v58 = vmul.f32 %v26, %v42
    %v59 = vmul.f32 %v27, %v43
    %v60 = vmul.f32 %v28, %v44
    %v61 = vmul.f32 %v29, %v45
    %v62 = vmul.f32 %v30, %v46
    %v63 = vmul.f32 %v31, %v47
    %v64 = vmul.f32 %v32, %v48
    %v65 = vmul.f32 %v33, %v49
    %v74 = vrot.slane %v59, 7
    %vm75 = vcmask 1041409
    %v76 = vsel %vm75, %v74, %v58
    %v77 = vrot.slane %v60, 6
    %vm78 = vcmask 1042434
    %v79 = vsel %vm78, %v77, %v76
    %v80 = vrot.slane %v61, 5
    %vm81 = vcmask 1043459
    %v82 = vsel %vm81, %v80, %v79
    %v83 = vrot.slane %v62, 4
    %vm84 = vcmask 1044484
    %v85 = vsel %vm84, %v83, %v82
    %v86 = vrot.slane %v63, 3
    %vm87 = vcmask 1045509
    %v88 = vsel %vm87, %v86, %v85
    %v89 = vrot.slane %v64, 2
    %vm90 = vcmask 1046534
    %v91 = vsel %vm90, %v89, %v88
    %v92 = vrot.slane %v65, 1
    %vm93 = vcmask 1047559
    %v94 = vsel %vm93, %v92, %v91
    %vm96 = vcmask 261120
    %v97 = vsel %vm96, %v94, 0.0
    %98 = vadd.xlane.f32.xlu0 %v97
    %v99 = vpop.xlane.xlu0 %98
    %v100 = vmul.f32 %v26, %v26
    %v101 = vmul.f32 %v27, %v27
    %v102 = vmul.f32 %v28, %v28
    %v103 = vmul.f32 %v29, %v29
    %v104 = vmul.f32 %v30, %v30
    %v105 = vmul.f32 %v31, %v31
    %v106 = vmul.f32 %v32, %v32
    %v107 = vmul.f32 %v33, %v33
    %v116 = vrot.slane %v101, 7
    %v117 = vsel %vm75, %v116, %v100
    %v118 = vrot.slane %v102, 6
    %v119 = vsel %vm78, %v118, %v117
    %v120 = vrot.slane %v103, 5
    %v121 = vsel %vm81, %v120, %v119
    %v122 = vrot.slane %v104, 4
    %v123 = vsel %vm84, %v122, %v121
    %v124 = vrot.slane %v105, 3
    %v125 = vsel %vm87, %v124, %v123
    %v126 = vrot.slane %v106, 2
    %v127 = vsel %vm90, %v126, %v125
    %v128 = vrot.slane %v107, 1
    %v129 = vsel %vm93, %v128, %v127
    %v131 = vsel %vm96, %v129, 0.0
    %132 = vadd.xlane.f32.xlu0 %v131
    %v133 = vpop.xlane.xlu0 %132
    %v134 = vsel %vm78, %v116, %v100
    %v135 = vsel %vm81, %v118, %v134
    %v136 = vsel %vm84, %v120, %v135
    %v137 = vsel %vm87, %v122, %v136
    %v138 = vsel %vm90, %v124, %v137
    %v139 = vsel %vm93, %v126, %v138
    %vm142 = vcmask 261121
    %v143 = vsel %vm142, %v139, 0.0
    %144 = vadd.xlane.f32.xlu0 %v143
    %v145 = vpop.xlane.xlu0 %144
    %vm146 = vcmask 253952
    %v147 = vsel %vm146, %v128, 0.0
    %148 = vadd.xlane.f32.xlu0 %v147
    %v149 = vpop.xlane.xlu0 %148
    %s150 = smul.f32 %s24, 2.0
    %v151 = vstv %s150
    %v152 = vmul.f32 %v151, %v99
    %v153 = vadd.f32 %v152, 1.0
    %v154 = vstv %s24
    %v155 = vmul.f32 %v154, %v145
    %v156 = vmul.f32 %v154, %v149
    %vm159 = vcmask 1046528
    %v160 = vrot.slane %v155, 1
    %v161 = vrot.slane %v156, 1
    %v162 = vsel %vm159, %v160, %v161
    %v164 = vadd.f32 %v153, %v162
    %166 = vset.pattern.permute.xlu0 0
    %167 = vperm.xlu0 %166, %v164
    %v168 = vpop.permute.xlu0 %167
    %v170 = vrot.slane %v27, 7
    %v171 = vsel %vm75, %v170, %v26
    %v172 = vrot.slane %v28, 6
    %v173 = vsel %vm78, %v172, %v171
    %v174 = vrot.slane %v29, 5
    %v175 = vsel %vm81, %v174, %v173
    %v176 = vrot.slane %v30, 4
    %v177 = vsel %vm84, %v176, %v175
    %v178 = vrot.slane %v31, 3
    %v179 = vsel %vm87, %v178, %v177
    %v180 = vrot.slane %v32, 2
    %v181 = vsel %vm90, %v180, %v179
    %v182 = vsel %vm93, %v49, %v181
    %v184 = vmul.f32 %v168, %v182
    %v185 = vmul.f32 %v154, %v133
    %v186 = vsub.f32 1.0, %v185
    %v187 = vsel %vm75, %v27, %v42
    %v188 = vrot.slane %v28, 7
    %v189 = vsel %vm78, %v188, %v187
    %v190 = vrot.slane %v29, 6
    %v191 = vsel %vm81, %v190, %v189
    %v192 = vrot.slane %v30, 5
    %v193 = vsel %vm84, %v192, %v191
    %v194 = vrot.slane %v31, 4
    %v195 = vsel %vm87, %v194, %v193
    %v196 = vrot.slane %v32, 3
    %v197 = vsel %vm90, %v196, %v195
    %v198 = vrot.slane %v33, 2
    %v199 = vsel %vm93, %v198, %v197
    %v201 = vmul.f32 %v186, %v199
    %v202 = vadd.f32 %v184, %v201
    %s203 = smul.f32 %s24, %s24
    %v204 = vstv %s203
    %v205 = vmul.f32 %v204, %v133
    %v208 = vrot.slane %v145, 1
    %v209 = vrot.slane %v149, 1
    %v210 = vsel %vm159, %v208, %v209
    %v212 = vmul.f32 %v205, %v210
    %v213 = vadd.f32 %v153, %v212
    %215 = vset.pattern.permute.xlu0 0
    %216 = vperm.xlu0 %215, %v213
    %v217 = vpop.permute.xlu0 %216
    %v219 = vrcp.pop %v217
    %v220 = vmul.f32 %v202, %v219
    %v221 = vrot.slane %v26, 2
    %v222 = vsel %vm75, %v43, %v221
    %v223 = vsel %vm78, %v28, %v222
    %v224 = vrot.slane %v29, 7
    %v225 = vsel %vm81, %v224, %v223
    %v226 = vrot.slane %v30, 6
    %v227 = vsel %vm84, %v226, %v225
    %v228 = vrot.slane %v31, 5
    %v229 = vsel %vm87, %v228, %v227
    %v230 = vrot.slane %v32, 4
    %v231 = vsel %vm90, %v230, %v229
    %v232 = vrot.slane %v33, 3
    %v233 = vsel %vm93, %v232, %v231
    %v235 = vsub.f32 %v220, %v233
    %v236 = vmul.f32 %v235, %v235
    %v237 = vsel %vm96, %v236, 0.0
    %238 = vadd.xlane.f32.xlu0 %v237
    %v239 = vpop.xlane.xlu0 %238
    %v240 = vrsqrt.pop %v239
    %v241 = vmul.f32 %v239, %v240
    %vm242 = vcmp.eq.f32.partialorder %v239, inf
    %v243 = vsel %vm242, %v239, %v241
    %vm244 = vcmp.eq.f32.partialorder %v239, 0.0
    %v245 = vand.u32 %v239, 2147483648
    %v246 = vsel %vm244, %v245, %v243
    %v247 = vsub.f32 0.0, %v246
    %v248 = vsel %vm84, %v74, %v58
    %v249 = vsel %vm87, %v77, %v248
    %v250 = vsel %vm90, %v80, %v249
    %v251 = vsel %vm93, %v83, %v250
    %v252 = vsel %vm75, %v89, %v86
    %v253 = vsel %vm78, %v92, %v252
    %vm256 = vcmask 261123
    %v257 = vsel %vm256, %v251, 0.0
    %258 = vadd.xlane.f32.xlu0 %v257
    %v259 = vpop.xlane.xlu0 %258
    %vm260 = vcmask 256000
    %v261 = vsel %vm260, %v253, 0.0
    %262 = vadd.xlane.f32.xlu0 %v261
    %v263 = vpop.xlane.xlu0 %262
    %v264 = vsel %vm84, %v116, %v100
    %v265 = vsel %vm87, %v118, %v264
    %v266 = vsel %vm90, %v120, %v265
    %v267 = vsel %vm93, %v122, %v266
    %v268 = vsel %vm75, %v126, %v124
    %v269 = vsel %vm78, %v128, %v268
    %v272 = vsel %vm256, %v267, 0.0
    %273 = vadd.xlane.f32.xlu0 %v272
    %v274 = vpop.xlane.xlu0 %273
    %v275 = vsel %vm260, %v269, 0.0
    %276 = vadd.xlane.f32.xlu0 %v275
    %v277 = vpop.xlane.xlu0 %276
    %v278 = vsel %vm87, %v116, %v100
    %v279 = vsel %vm90, %v118, %v278
    %v280 = vsel %vm93, %v120, %v279
    %v281 = vsel %vm75, %v124, %v122
    %v282 = vsel %vm78, %v126, %v281
    %v283 = vsel %vm81, %v128, %v282
    %vm286 = vcmask 261124
    %v287 = vsel %vm286, %v280, 0.0
    %288 = vadd.xlane.f32.xlu0 %v287
    %v289 = vpop.xlane.xlu0 %288
    %vm290 = vcmask 257024
    %v291 = vsel %vm290, %v283, 0.0
    %292 = vadd.xlane.f32.xlu0 %v291
    %v293 = vpop.xlane.xlu0 %292
    %v294 = vmul.f32 %v151, %v259
    %v295 = vmul.f32 %v151, %v263
    %v296 = vadd.f32 %v294, 1.0
    %v297 = vadd.f32 %v295, 1.0
    %v298 = vmul.f32 %v154, %v289
    %v299 = vmul.f32 %v154, %v293
    %v302 = vrot.slane %v298, 1
    %v303 = vrot.slane %v299, 1
    %v304 = vsel %vm159, %v302, %v303
    %v307 = vadd.f32 %v296, %v304
    %v308 = vadd.f32 %v297, %v303
    %310 = vset.pattern.permute.xlu0 0
    %311 = vperm.xlu0 %310, %v307
    %v312 = vpop.permute.xlu0 %311
    %315 = vset.pattern.permute.xlu0 0
    %316 = vperm.xlu0 %315, %v308
    %v317 = vpop.permute.xlu0 %316
    %v319 = vsel %vm84, %v170, %v26
    %v320 = vsel %vm87, %v172, %v319
    %v321 = vsel %vm90, %v174, %v320
    %v322 = vsel %vm93, %v176, %v321
    %v323 = vsel %vm75, %v180, %v178
    %v324 = vsel %vm78, %v49, %v323
    %v327 = vmul.f32 %v312, %v322
    %v328 = vmul.f32 %v317, %v324
    %v329 = vmul.f32 %v154, %v274
    %v330 = vmul.f32 %v154, %v277
    %v331 = vsub.f32 1.0, %v329
    %v332 = vsub.f32 1.0, %v330
    %v333 = vsel %vm84, %v27, %v42
    %v334 = vsel %vm87, %v188, %v333
    %v335 = vsel %vm90, %v190, %v334
    %v336 = vsel %vm93, %v192, %v335
    %v337 = vsel %vm75, %v196, %v194
    %v338 = vsel %vm78, %v198, %v337
    %v341 = vmul.f32 %v331, %v336
    %v342 = vmul.f32 %v332, %v338
    %v343 = vadd.f32 %v327, %v341
    %v344 = vadd.f32 %v328, %v342
    %v345 = vmul.f32 %v204, %v274
    %v346 = vmul.f32 %v204, %v277
    %v349 = vrot.slane %v289, 1
    %v350 = vrot.slane %v293, 1
    %v351 = vsel %vm159, %v349, %v350
    %v354 = vmul.f32 %v345, %v351
    %v355 = vmul.f32 %v346, %v350
    %v356 = vadd.f32 %v296, %v354
    %v357 = vadd.f32 %v297, %v355
    %359 = vset.pattern.permute.xlu0 0
    %360 = vperm.xlu0 %359, %v356
    %v361 = vpop.permute.xlu0 %360
    %364 = vset.pattern.permute.xlu0 0
    %365 = vperm.xlu0 %364, %v357
    %v366 = vpop.permute.xlu0 %365
    %v368 = vrcp.pop %v361
    %v369 = vmul.f32 %v343, %v368
    %v370 = vrcp.pop %v366
    %v371 = vmul.f32 %v344, %v370
    %v372 = vsel %vm84, %v43, %v221
    %v373 = vsel %vm87, %v28, %v372
    %v374 = vsel %vm90, %v224, %v373
    %v375 = vsel %vm93, %v226, %v374
    %v376 = vsel %vm75, %v230, %v228
    %v377 = vsel %vm78, %v232, %v376
    %v380 = vsub.f32 %v369, %v375
    %v381 = vsub.f32 %v371, %v377
    %v382 = vmul.f32 %v380, %v380
    %v383 = vmul.f32 %v381, %v381
    %v384 = vsel %vm256, %v382, 0.0
    %385 = vadd.xlane.f32.xlu0 %v384
    %v386 = vpop.xlane.xlu0 %385
    %v387 = vsel %vm260, %v383, 0.0
    %388 = vadd.xlane.f32.xlu0 %v387
    %v389 = vpop.xlane.xlu0 %388
    %v390 = vrsqrt.pop %v386
    %v391 = vmul.f32 %v386, %v390
    %vm392 = vcmp.eq.f32.partialorder %v386, inf
    %v393 = vsel %vm392, %v386, %v391
    %vm394 = vcmp.eq.f32.partialorder %v386, 0.0
    %v395 = vand.u32 %v386, 2147483648
    %v396 = vsel %vm394, %v395, %v393
    %v397 = vrsqrt.pop %v389
    %v398 = vmul.f32 %v389, %v397
    %vm399 = vcmp.eq.f32.partialorder %v389, inf
    %v400 = vsel %vm399, %v389, %v398
    %vm401 = vcmp.eq.f32.partialorder %v389, 0.0
    %v402 = vand.u32 %v389, 2147483648
    %v403 = vsel %vm401, %v402, %v400
    %v404 = vsub.f32 0.0, %v396
    %v405 = vsub.f32 0.0, %v403
    %v407 = vrot.slane %v247, 5
    %v409 = vsub.f32 %v404, %v407
    %v410 = vsub.f32 %v405, %v407
    %v411 = vstv %s25
    %v412 = vadd.f32 %v409, %v411
    %v413 = vadd.f32 %v410, %v411
    %v414 = vmax.f32 %v412, 0.0
    %v415 = vmax.f32 %v413, 0.0
    %vm416 = vcmask 7171
    %417 = vst.msk [vmem:[%s2 - $0x3] sm:$0xf8] %vm416, %v414
    %vm418 = vcmask 2048
    %419 = vst.msk [vmem:[%s2 + $0x5] sm:$0x7] %vm418, %v415
    // Predicated region
    $region14: #{tpu_custom_call.1} parent=1 // pred_check
      _
    $region15: #{tpu_custom_call.1} parent=1 // pred_check_branch
      %421 = sbr.rel (0) target = $region17
    $region16: #{tpu_custom_call.1} parent=1 // pred_region
      _
    $region17: #{tpu_custom_call.1} parent=1 // pred_fallthru
      _
    // Predicated region
    $region18: #{tpu_custom_call.1} parent=1 // pred_check
      _
    $region19: #{tpu_custom_call.1} parent=1 // pred_check_branch
      %423 = sbr.rel (0) target = $region21
    $region20: #{tpu_custom_call.1} parent=1 // pred_region
      _
    $region21: #{tpu_custom_call.1} parent=1 // pred_fallthru
      _
    %424 = vsyncpa [#allocation3], 1

</llo_original>
